<compile_context>
chip_gen: v7x
topology: tpu7x:2x2x1
jax: 0.10.0
libtpu: 0.0.40
codegen_flags: <defaults>
</compile_context>

<pallas_src>
import functools

import jax
import jax.numpy as jnp
from jax.experimental import pallas as pl
from jax.experimental.pallas import tpu as pltpu

LANE = 128


def _round_up(x, m):
    return ((x + m - 1) // m) * m


def _pad2d(a, rows, cols):
    return jnp.pad(a, ((0, rows - a.shape[0]), (0, cols - a.shape[1])))


def _softplus(x):
    # Numerically stable softplus matching F.softplus; exp/log1p land on the EUP slot.
    return jnp.maximum(x, 0.0) + jnp.log1p(jnp.exp(-jnp.abs(x)))


def unified_kernel(
    x_ref,
    fw1_ref, fb1_ref, fw2_ref, fb2_ref,          # FeatureNetwork
    aw1_ref, ab1_ref, aw2_ref, ab2_ref,          # Abduction shared MLP
    hw_ref, hb_ref,                              # fused location|scale head
    cw_ref, cb_ref,                              # ActionNetwork
    out_ref,                                     # packed output slab
    *, n_classes, latent_dim, lat_p, cls_p, compact,
):
    od = fw1_ref.dtype
    x = x_ref[...]

    # ---- FeatureNetwork: Linear -> ReLU -> Linear (f32 MXU accumulation) ----
    h = jnp.dot(x, fw1_ref[...], preferred_element_type=jnp.float32) + fb1_ref[...]
    h = jnp.maximum(h, 0.0)
    rep = jnp.dot(h.astype(od), fw2_ref[...],
                  preferred_element_type=jnp.float32) + fb2_ref[...]

    # ---- AbductionNetwork shared MLP: Linear -> ReLU -> Linear -> ReLU ----
    h = jnp.dot(rep.astype(od), aw1_ref[...],
                preferred_element_type=jnp.float32) + ab1_ref[...]
    h = jnp.maximum(h, 0.0)
    h = jnp.dot(h.astype(od), aw2_ref[...],
                preferred_element_type=jnp.float32) + ab2_ref[...]
    h = jnp.maximum(h, 0.0)

    # ---- fused location / scale heads: one matmul, split at a 128 boundary ----
    ls = jnp.dot(h.astype(od), hw_ref[...],
                 preferred_element_type=jnp.float32) + hb_ref[...]
    loc = ls[:, :lat_p]
    scale = _softplus(ls[:, lat_p:])

    # ---- ActionNetwork: logits from location_param ----
    logits = jnp.dot(loc.astype(od), cw_ref[...],
                     preferred_element_type=jnp.float32) + cb_ref[...]

    if compact:
        # Pack logits|loc|scale into one 128-lane block: XLU lane rolls + VPU selects,
        # then a single unmasked, 128-aligned store (write-back DMA is the bottleneck).
        tb = logits.shape[0]
        lane = jax.lax.broadcasted_iota(jnp.int32, (tb, LANE), 1)
        loc_sh = pltpu.roll(loc, shift=n_classes, axis=1)
        scale_sh = pltpu.roll(scale, shift=n_classes + latent_dim, axis=1)
        packed = jnp.where(
            lane < n_classes, logits,
            jnp.where(lane < n_classes + latent_dim, loc_sh, scale_sh))
        out_ref[...] = packed
    else:
        # Fallback for wide heads: 128-aligned sub-blocks, still unmasked stores.
        out_ref[:, :cls_p] = logits
        out_ref[:, cls_p:cls_p + lat_p] = loc
        out_ref[:, cls_p + lat_p:] = scale


def init_params(key, input_dim, representation_dim, latent_dim, n_classes,
                feature_hidden_dims, abduction_hidden_dims):
    """Deterministic synthetic init. Weights stored as [in_dim, out_dim]."""
    params = []

    def linear(key, fan_in, fan_out):
        kw, kb = jax.random.split(key)
        limit = 1.0 / jnp.sqrt(fan_in)
        w = jax.random.uniform(kw, (fan_in, fan_out), jnp.float32, -limit, limit)
        b = jax.random.uniform(kb, (1, fan_out), jnp.float32, -limit, limit)
        return w, b

    keys = jax.random.split(key, 16)
    ki = iter(keys)

    # FeatureNetwork: input_dim -> feature_hidden_dims[...] -> representation_dim
    prev = input_dim
    for h in feature_hidden_dims:
        params.extend(linear(next(ki), prev, h))
        prev = h
    params.extend(linear(next(ki), prev, representation_dim))

    # Abduction shared MLP: representation_dim -> abduction_hidden_dims[...]
    prev = representation_dim
    for h in abduction_hidden_dims:
        params.extend(linear(next(ki), prev, h))
        prev = h

    # location / scale heads
    params.extend(linear(next(ki), prev, latent_dim))
    params.extend(linear(next(ki), prev, latent_dim))

    # ActionNetwork
    params.extend(linear(next(ki), latent_dim, n_classes))

    return params


def unified_forward(x, params, *, tile_batch=1024, operand_dtype=jnp.bfloat16):
    (fw1, fb1, fw2, fb2, aw1, ab1, aw2, ab2, lw, lb, sw, sb, cw, cb) = params
    batch, input_dim = x.shape
    latent_dim = lw.shape[1]
    n_classes = cw.shape[1]
    f32 = jnp.float32
    od = jnp.dtype(operand_dtype)

    # ---- lane-padded widths for weights only (x keeps its true feature width) ----
    h1_p = _round_up(fw1.shape[1], LANE)
    rep_p = _round_up(fw2.shape[1], LANE)
    a1_p = _round_up(aw1.shape[1], LANE)
    a2_p = _round_up(aw2.shape[1], LANE)
    lat_p = _round_up(latent_dim, LANE)
    cls_p = _round_up(n_classes, LANE)

    # Compact output: payload (n_classes + 2*latent) fits one 128-lane block.
    compact = (n_classes + 2 * latent_dim) <= LANE
    out_w = LANE if compact else cls_p + 2 * lat_p

    # ---- batch tiling (sublane granularity depends on operand packing) ----
    sub = 8 if od.itemsize >= 4 else 16
    tb = _round_up(min(tile_batch, _round_up(batch, sub)), sub)
    # v7x has 2 TensorCores: ensure >=2 grid steps when the batch allows, so the
    # "parallel" axis can actually shard.  Irrelevant (but harmless) on v5e/v6e.
    if batch > sub and _round_up(batch, tb) // tb < 2:
        half = -(-_round_up(batch, sub) // 2)
        tb = _round_up(half, sub)
    batch_p = _round_up(batch, tb)
    n_tiles = batch_p // tb

    # ---- zero-pad / pack parameters (bf16 matmul operands, f32 biases) ----
    fw1p = _pad2d(fw1, input_dim, h1_p).astype(od)
    fb1p = _pad2d(fb1, 1, h1_p).astype(f32)
    fw2p = _pad2d(fw2, h1_p, rep_p).astype(od)
    fb2p = _pad2d(fb2, 1, rep_p).astype(f32)
    aw1p = _pad2d(aw1, rep_p, a1_p).astype(od)
    ab1p = _pad2d(ab1, 1, a1_p).astype(f32)
    aw2p = _pad2d(aw2, a1_p, a2_p).astype(od)
    ab2p = _pad2d(ab2, 1, a2_p).astype(f32)

    # Fused location|scale head: [a2_p, 2*lat_p]
    hw = jnp.zeros((a2_p, 2 * lat_p), f32)
    hw = hw.at[:lw.shape[0], :latent_dim].set(lw)
    hw = hw.at[:sw.shape[0], lat_p:lat_p + latent_dim].set(sw)
    hb = jnp.zeros((1, 2 * lat_p), f32)
    hb = hb.at[:, :latent_dim].set(lb)
    hb = hb.at[:, lat_p:lat_p + latent_dim].set(sb)
    hwp = hw.astype(od)
    hbp = hb.astype(f32)

    cwp = _pad2d(cw, lat_p, cls_p).astype(od)
    cbp = _pad2d(cb, 1, cls_p).astype(f32)

    # x: only batch-dim zero pad + dtype cast (no lane padding materialized in HBM).
    xp = _pad2d(x, batch_p, input_dim).astype(od)

    weight_args = (fw1p, fb1p, fw2p, fb2p, aw1p, ab1p, aw2p, ab2p,
                   hwp, hbp, cwp, cbp)

    # ---- BlockSpecs: batch-tiled activations, VMEM-resident weights ----
    x_spec = pl.BlockSpec((tb, input_dim), lambda i: (i, 0))
    out_spec = pl.BlockSpec((tb, out_w), lambda i: (i, 0))

    def pinned(a):
        # Constant block index -> weight stays VMEM-resident across grid steps.
        # (Could single-buffer via pipeline_mode=pl.Buffered(1); negligible here.)
        return pl.BlockSpec(a.shape, lambda i: (0, 0))

    in_specs = [x_spec] + [pinned(a) for a in weight_args]

    # ---- cost estimate reflecting real (bf16 / unpadded-x / compact-out) traffic ----
    weight_bytes = sum(int(a.size) * a.dtype.itemsize for a in weight_args)
    x_bytes = batch_p * input_dim * od.itemsize
    out_bytes = batch_p * out_w * 4
    flops = 2 * batch_p * (input_dim * h1_p + h1_p * rep_p + rep_p * a1_p
                           + a1_p * a2_p + a2_p * 2 * lat_p + lat_p * cls_p)
    cost = pl.CostEstimate(flops=flops,
                           transcendentals=2 * batch_p * lat_p,
                           bytes_accessed=x_bytes + weight_bytes + out_bytes)

    # ---- explicit VMEM budget (double-buffered x/out tiles + resident weights) ----
    buf_bytes = 2 * (tb * input_dim * od.itemsize + tb * out_w * 4) + 2 * weight_bytes
    vmem_limit = int(min(max(4 * buf_bytes, 8 * 1024 * 1024), 64 * 1024 * 1024))

    kernel = functools.partial(unified_kernel, n_classes=n_classes,
                               latent_dim=latent_dim, lat_p=lat_p, cls_p=cls_p,
                               compact=compact)

    out = pl.pallas_call(
        kernel,
        out_shape=jax.ShapeDtypeStruct((batch_p, out_w), jnp.float32),
        grid=(n_tiles,),
        in_specs=in_specs,
        out_specs=out_spec,
        compiler_params=pltpu.CompilerParams(
            dimension_semantics=("parallel",),
            vmem_limit_bytes=vmem_limit,
        ),
        cost_estimate=cost,
    )(xp, *weight_args)

    # ---- unpack the packed slab (consumers could also take `out` directly) ----
    if compact:
        logits = out[:batch, :n_classes]
        loc = out[:batch, n_classes:n_classes + latent_dim]
        scale = out[:batch, n_classes + latent_dim:n_classes + 2 * latent_dim]
    else:
        logits = out[:batch, :n_classes]
        loc = out[:batch, cls_p:cls_p + latent_dim]
        scale = out[:batch, cls_p + lat_p:cls_p + lat_p + latent_dim]
    return logits, loc, scale


def reference_forward(x, params):
    (fw1, fb1, fw2, fb2, aw1, ab1, aw2, ab2, lw, lb, sw, sb, cw, cb) = params
    h = jnp.maximum(x @ fw1 + fb1, 0.0)
    rep = h @ fw2 + fb2
    h = jnp.maximum(rep @ aw1 + ab1, 0.0)
    h = jnp.maximum(h @ aw2 + ab2, 0.0)
    loc = h @ lw + lb
    scale = jax.nn.softplus(h @ sw + sb)
    logits = loc @ cw + cb
    return logits, loc, scale


if __name__ == "__main__":
    # Small shapes consistent with the module's constructor defaults.
    input_dim = 32
    representation_dim = 16
    latent_dim = 8
    n_classes = 4
    feature_hidden_dims = [64]
    abduction_hidden_dims = [64, 32]
    batch = 4

    key = jax.random.PRNGKey(0)
    kx, kp = jax.random.split(key)
    x = jax.random.normal(kx, (batch, input_dim), jnp.float32)
    params = init_params(kp, input_dim, representation_dim, latent_dim,
                         n_classes, feature_hidden_dims, abduction_hidden_dims)

    ref_logits, ref_loc, ref_scale = reference_forward(x, params)

    # Default (perf) path: bf16 matmul operands, f32 accumulation -> loose tolerance.
    logits, loc, scale = unified_forward(x, params)
    jax.block_until_ready((logits, loc, scale))
    assert logits.shape == (batch, n_classes)
    assert loc.shape == (batch, latent_dim)
    assert scale.shape == (batch, latent_dim)
    assert jnp.allclose(logits, ref_logits, atol=5e-2, rtol=5e-2)
    assert jnp.allclose(loc, ref_loc, atol=5e-2, rtol=5e-2)
    assert jnp.allclose(scale, ref_scale, atol=5e-2, rtol=5e-2)
    assert bool(jnp.all(scale > 0.0))

    # f32 operand path: tight check of the exact kernel math (same code path otherwise).
    logits32, loc32, scale32 = unified_forward(x, params, operand_dtype=jnp.float32)
    jax.block_until_ready((logits32, loc32, scale32))
    assert jnp.allclose(logits32, ref_logits, atol=1e-5, rtol=1e-5)
    assert jnp.allclose(loc32, ref_loc, atol=1e-5, rtol=1e-5)
    assert jnp.allclose(scale32, ref_scale, atol=1e-5, rtol=1e-5)

    print("KERNEL_OK")
</pallas_src>

<mosaic_0001>
module attributes {stable_mosaic.version = 11 : i64} {
  func.func @unified_kernel(%arg0: i32, %arg1: memref<16x32xbf16, #tpu.memory_space<vmem>>, %arg2: memref<32x128xbf16, #tpu.memory_space<vmem>>, %arg3: memref<1x128xf32, #tpu.memory_space<vmem>>, %arg4: memref<128x128xbf16, #tpu.memory_space<vmem>>, %arg5: memref<1x128xf32, #tpu.memory_space<vmem>>, %arg6: memref<128x128xbf16, #tpu.memory_space<vmem>>, %arg7: memref<1x128xf32, #tpu.memory_space<vmem>>, %arg8: memref<128x128xbf16, #tpu.memory_space<vmem>>, %arg9: memref<1x128xf32, #tpu.memory_space<vmem>>, %arg10: memref<128x256xbf16, #tpu.memory_space<vmem>>, %arg11: memref<1x256xf32, #tpu.memory_space<vmem>>, %arg12: memref<128x128xbf16, #tpu.memory_space<vmem>>, %arg13: memref<1x128xf32, #tpu.memory_space<vmem>>, %arg14: memref<16x128xf32, #tpu.memory_space<vmem>>) attributes {dimension_semantics = [#tpu.dimension_semantics<parallel>], iteration_bounds = array<i64: 1>, scalar_prefetch = 0 : i64, scratch_operands = 0 : i64, tpu.core_type = #tpu.core_type<tc>, window_params = [{transform_indices = @transform_0, window_bounds = array<i64: 16, 32>}, {pipeline_mode = #tpu.pipeline_mode<synchronous>, transform_indices = @transform_1, window_bounds = array<i64: 32, 128>}, {pipeline_mode = #tpu.pipeline_mode<synchronous>, transform_indices = @transform_2, window_bounds = array<i64: 1, 128>}, {pipeline_mode = #tpu.pipeline_mode<synchronous>, transform_indices = @transform_3, window_bounds = array<i64: 128, 128>}, {pipeline_mode = #tpu.pipeline_mode<synchronous>, transform_indices = @transform_4, window_bounds = array<i64: 1, 128>}, {pipeline_mode = #tpu.pipeline_mode<synchronous>, transform_indices = @transform_5, window_bounds = array<i64: 128, 128>}, {pipeline_mode = #tpu.pipeline_mode<synchronous>, transform_indices = @transform_6, window_bounds = array<i64: 1, 128>}, {pipeline_mode = #tpu.pipeline_mode<synchronous>, transform_indices = @transform_7, window_bounds = array<i64: 128, 128>}, {pipeline_mode = #tpu.pipeline_mode<synchronous>, transform_indices = @transform_8, window_bounds = array<i64: 1, 128>}, {pipeline_mode = #tpu.pipeline_mode<synchronous>, transform_indices = @transform_9, window_bounds = array<i64: 128, 256>}, {pipeline_mode = #tpu.pipeline_mode<synchronous>, transform_indices = @transform_10, window_bounds = array<i64: 1, 256>}, {pipeline_mode = #tpu.pipeline_mode<synchronous>, transform_indices = @transform_11, window_bounds = array<i64: 128, 128>}, {pipeline_mode = #tpu.pipeline_mode<synchronous>, transform_indices = @transform_12, window_bounds = array<i64: 1, 128>}, {transform_indices = @transform_13, window_bounds = array<i64: 16, 128>}]} {
    %c0 = arith.constant 0 : index
    %c0_0 = arith.constant 0 : index
    %0 = vector.load %arg1[%c0, %c0_0] : memref<16x32xbf16, #tpu.memory_space<vmem>>, vector<16x32xbf16>
    %c0_1 = arith.constant 0 : index
    %c0_2 = arith.constant 0 : index
    %1 = vector.load %arg2[%c0_1, %c0_2] : memref<32x128xbf16, #tpu.memory_space<vmem>>, vector<32x128xbf16>
    %cst = arith.constant dense<0.000000e+00> : vector<16x128xf32>
    %2 = tpu.matmul %0, %1, %cst {dimension_numbers = #tpu.dot_dimension_numbers<[1], [0], [0], [1], [0, 0, 1, 1], [], []>} : vector<16x32xbf16>, vector<32x128xbf16>, vector<16x128xf32> -> vector<16x128xf32>
    %c0_3 = arith.constant 0 : index
    %c0_4 = arith.constant 0 : index
    %3 = vector.load %arg3[%c0_3, %c0_4] : memref<1x128xf32, #tpu.memory_space<vmem>>, vector<1x128xf32>
    %4 = vector.broadcast %3 : vector<1x128xf32> to vector<16x128xf32>
    %5 = arith.addf %2, %4 : vector<16x128xf32>
    %cst_5 = arith.constant 0.000000e+00 : f32
    %6 = vector.broadcast %cst_5 : f32 to vector<16x128xf32>
    %7 = arith.maximumf %5, %6 : vector<16x128xf32>
    %8 = arith.truncf %7 : vector<16x128xf32> to vector<16x128xbf16>
    %c0_6 = arith.constant 0 : index
    %c0_7 = arith.constant 0 : index
    %9 = vector.load %arg4[%c0_6, %c0_7] : memref<128x128xbf16, #tpu.memory_space<vmem>>, vector<128x128xbf16>
    %cst_8 = arith.constant dense<0.000000e+00> : vector<16x128xf32>
    %10 = tpu.matmul %8, %9, %cst_8 {dimension_numbers = #tpu.dot_dimension_numbers<[1], [0], [0], [1], [0, 0, 1, 1], [], []>} : vector<16x128xbf16>, vector<128x128xbf16>, vector<16x128xf32> -> vector<16x128xf32>
    %c0_9 = arith.constant 0 : index
    %c0_10 = arith.constant 0 : index
    %11 = vector.load %arg5[%c0_9, %c0_10] : memref<1x128xf32, #tpu.memory_space<vmem>>, vector<1x128xf32>
    %12 = vector.broadcast %11 : vector<1x128xf32> to vector<16x128xf32>
    %13 = arith.addf %10, %12 : vector<16x128xf32>
    %14 = arith.truncf %13 : vector<16x128xf32> to vector<16x128xbf16>
    %c0_11 = arith.constant 0 : index
    %c0_12 = arith.constant 0 : index
    %15 = vector.load %arg6[%c0_11, %c0_12] : memref<128x128xbf16, #tpu.memory_space<vmem>>, vector<128x128xbf16>
    %cst_13 = arith.constant dense<0.000000e+00> : vector<16x128xf32>
    %16 = tpu.matmul %14, %15, %cst_13 {dimension_numbers = #tpu.dot_dimension_numbers<[1], [0], [0], [1], [0, 0, 1, 1], [], []>} : vector<16x128xbf16>, vector<128x128xbf16>, vector<16x128xf32> -> vector<16x128xf32>
    %c0_14 = arith.constant 0 : index
    %c0_15 = arith.constant 0 : index
    %17 = vector.load %arg7[%c0_14, %c0_15] : memref<1x128xf32, #tpu.memory_space<vmem>>, vector<1x128xf32>
    %18 = vector.broadcast %17 : vector<1x128xf32> to vector<16x128xf32>
    %19 = arith.addf %16, %18 : vector<16x128xf32>
    %cst_16 = arith.constant 0.000000e+00 : f32
    %20 = vector.broadcast %cst_16 : f32 to vector<16x128xf32>
    %21 = arith.maximumf %19, %20 : vector<16x128xf32>
    %22 = arith.truncf %21 : vector<16x128xf32> to vector<16x128xbf16>
    %c0_17 = arith.constant 0 : index
    %c0_18 = arith.constant 0 : index
    %23 = vector.load %arg8[%c0_17, %c0_18] : memref<128x128xbf16, #tpu.memory_space<vmem>>, vector<128x128xbf16>
    %cst_19 = arith.constant dense<0.000000e+00> : vector<16x128xf32>
    %24 = tpu.matmul %22, %23, %cst_19 {dimension_numbers = #tpu.dot_dimension_numbers<[1], [0], [0], [1], [0, 0, 1, 1], [], []>} : vector<16x128xbf16>, vector<128x128xbf16>, vector<16x128xf32> -> vector<16x128xf32>
    %c0_20 = arith.constant 0 : index
    %c0_21 = arith.constant 0 : index
    %25 = vector.load %arg9[%c0_20, %c0_21] : memref<1x128xf32, #tpu.memory_space<vmem>>, vector<1x128xf32>
    %26 = vector.broadcast %25 : vector<1x128xf32> to vector<16x128xf32>
    %27 = arith.addf %24, %26 : vector<16x128xf32>
    %cst_22 = arith.constant 0.000000e+00 : f32
    %28 = vector.broadcast %cst_22 : f32 to vector<16x128xf32>
    %29 = arith.maximumf %27, %28 : vector<16x128xf32>
    %30 = arith.truncf %29 : vector<16x128xf32> to vector<16x128xbf16>
    %c0_23 = arith.constant 0 : index
    %c0_24 = arith.constant 0 : index
    %31 = vector.load %arg10[%c0_23, %c0_24] : memref<128x256xbf16, #tpu.memory_space<vmem>>, vector<128x256xbf16>
    %cst_25 = arith.constant dense<0.000000e+00> : vector<16x256xf32>
    %32 = tpu.matmul %30, %31, %cst_25 {dimension_numbers = #tpu.dot_dimension_numbers<[1], [0], [0], [1], [0, 0, 1, 1], [], []>} : vector<16x128xbf16>, vector<128x256xbf16>, vector<16x256xf32> -> vector<16x256xf32>
    %c0_26 = arith.constant 0 : index
    %c0_27 = arith.constant 0 : index
    %33 = vector.load %arg11[%c0_26, %c0_27] : memref<1x256xf32, #tpu.memory_space<vmem>>, vector<1x256xf32>
    %34 = vector.broadcast %33 : vector<1x256xf32> to vector<16x256xf32>
    %35 = arith.addf %32, %34 : vector<16x256xf32>
    %36 = vector.extract_strided_slice %35 {offsets = [0, 0], sizes = [16, 128], strides = [1, 1]} : vector<16x256xf32> to vector<16x128xf32>
    %37 = vector.extract_strided_slice %35 {offsets = [0, 128], sizes = [16, 128], strides = [1, 1]} : vector<16x256xf32> to vector<16x128xf32>
    %cst_28 = arith.constant 0.000000e+00 : f32
    %38 = vector.broadcast %cst_28 : f32 to vector<16x128xf32>
    %39 = arith.maximumf %37, %38 : vector<16x128xf32>
    %40 = math.absf %37 : vector<16x128xf32>
    %cst_29 = arith.constant 0.000000e+00 : f32
    %41 = vector.broadcast %cst_29 : f32 to vector<16x128xf32>
    %42 = arith.subf %41, %40 : vector<16x128xf32>
    %43 = math.exp %42 : vector<16x128xf32>
    %44 = math.log1p %43 : vector<16x128xf32>
    %45 = arith.addf %39, %44 : vector<16x128xf32>
    %46 = arith.truncf %36 : vector<16x128xf32> to vector<16x128xbf16>
    %c0_30 = arith.constant 0 : index
    %c0_31 = arith.constant 0 : index
    %47 = vector.load %arg12[%c0_30, %c0_31] : memref<128x128xbf16, #tpu.memory_space<vmem>>, vector<128x128xbf16>
    %cst_32 = arith.constant dense<0.000000e+00> : vector<16x128xf32>
    %48 = tpu.matmul %46, %47, %cst_32 {dimension_numbers = #tpu.dot_dimension_numbers<[1], [0], [0], [1], [0, 0, 1, 1], [], []>} : vector<16x128xbf16>, vector<128x128xbf16>, vector<16x128xf32> -> vector<16x128xf32>
    %c0_33 = arith.constant 0 : index
    %c0_34 = arith.constant 0 : index
    %49 = vector.load %arg13[%c0_33, %c0_34] : memref<1x128xf32, #tpu.memory_space<vmem>>, vector<1x128xf32>
    %50 = vector.broadcast %49 : vector<1x128xf32> to vector<16x128xf32>
    %51 = arith.addf %48, %50 : vector<16x128xf32>
    %52 = tpu.iota {dimensions = array<i32: 1>} : vector<16x128xi32>
    %c4_i32 = arith.constant 4 : i32
    %53 = tpu.dynamic_rotate %36 by %c4_i32 dim 1 : vector<16x128xf32>, i32 -> vector<16x128xf32>
    %c12_i32 = arith.constant 12 : i32
    %54 = tpu.dynamic_rotate %45 by %c12_i32 dim 1 : vector<16x128xf32>, i32 -> vector<16x128xf32>
    %c4_i32_35 = arith.constant 4 : i32
    %55 = vector.broadcast %c4_i32_35 : i32 to vector<16x128xi32>
    %56 = arith.cmpi slt, %52, %55 : vector<16x128xi32>
    %c12_i32_36 = arith.constant 12 : i32
    %57 = vector.broadcast %c12_i32_36 : i32 to vector<16x128xi32>
    %58 = arith.cmpi slt, %52, %57 : vector<16x128xi32>
    %59 = arith.select %58, %53, %54 : vector<16x128xi1>, vector<16x128xf32>
    %60 = arith.select %56, %51, %59 : vector<16x128xi1>, vector<16x128xf32>
    %c0_37 = arith.constant 0 : index
    %c0_38 = arith.constant 0 : index
    %61 = vector.load %arg14[%c0_37, %c0_38] : memref<16x128xf32, #tpu.memory_space<vmem>>, vector<16x128xf32>
    tpu.vector_store %arg14[%c0_37, %c0_38], %60 {strides = array<i32>} : memref<16x128xf32, #tpu.memory_space<vmem>>, vector<16x128xf32>,
    return
  }
  func.func @transform_0(%arg0: i32) -> (i32, i32) {
    %c0_i32 = arith.constant 0 : i32
    %c0_i32_0 = arith.constant 0 : i32
    return %arg0, %c0_i32 : i32, i32
  }
  func.func @transform_1(%arg0: i32) -> (i32, i32) {
    %c0_i32 = arith.constant 0 : i32
    %c0_i32_0 = arith.constant 0 : i32
    %c0_i32_1 = arith.constant 0 : i32
    return %c0_i32, %c0_i32_0 : i32, i32
  }
  func.func @transform_2(%arg0: i32) -> (i32, i32) {
    %c0_i32 = arith.constant 0 : i32
    %c0_i32_0 = arith.constant 0 : i32
    %c0_i32_1 = arith.constant 0 : i32
    return %c0_i32, %c0_i32_0 : i32, i32
  }
  func.func @transform_3(%arg0: i32) -> (i32, i32) {
    %c0_i32 = arith.constant 0 : i32
    %c0_i32_0 = arith.constant 0 : i32
    %c0_i32_1 = arith.constant 0 : i32
    return %c0_i32, %c0_i32_0 : i32, i32
  }
  func.func @transform_4(%arg0: i32) -> (i32, i32) {
    %c0_i32 = arith.constant 0 : i32
    %c0_i32_0 = arith.constant 0 : i32
    %c0_i32_1 = arith.constant 0 : i32
    return %c0_i32, %c0_i32_0 : i32, i32
  }
  func.func @transform_5(%arg0: i32) -> (i32, i32) {
    %c0_i32 = arith.constant 0 : i32
    %c0_i32_0 = arith.constant 0 : i32
    %c0_i32_1 = arith.constant 0 : i32
    return %c0_i32, %c0_i32_0 : i32, i32
  }
  func.func @transform_6(%arg0: i32) -> (i32, i32) {
    %c0_i32 = arith.constant 0 : i32
    %c0_i32_0 = arith.constant 0 : i32
    %c0_i32_1 = arith.constant 0 : i32
    return %c0_i32, %c0_i32_0 : i32, i32
  }
  func.func @transform_7(%arg0: i32) -> (i32, i32) {
    %c0_i32 = arith.constant 0 : i32
    %c0_i32_0 = arith.constant 0 : i32
    %c0_i32_1 = arith.constant 0 : i32
    return %c0_i32, %c0_i32_0 : i32, i32
  }
  func.func @transform_8(%arg0: i32) -> (i32, i32) {
    %c0_i32 = arith.constant 0 : i32
    %c0_i32_0 = arith.constant 0 : i32
    %c0_i32_1 = arith.constant 0 : i32
    return %c0_i32, %c0_i32_0 : i32, i32
  }
  func.func @transform_9(%arg0: i32) -> (i32, i32) {
    %c0_i32 = arith.constant 0 : i32
    %c0_i32_0 = arith.constant 0 : i32
    %c0_i32_1 = arith.constant 0 : i32
    return %c0_i32, %c0_i32_0 : i32, i32
  }
  func.func @transform_10(%arg0: i32) -> (i32, i32) {
    %c0_i32 = arith.constant 0 : i32
    %c0_i32_0 = arith.constant 0 : i32
    %c0_i32_1 = arith.constant 0 : i32
    return %c0_i32, %c0_i32_0 : i32, i32
  }
  func.func @transform_11(%arg0: i32) -> (i32, i32) {
    %c0_i32 = arith.constant 0 : i32
    %c0_i32_0 = arith.constant 0 : i32
    %c0_i32_1 = arith.constant 0 : i32
    return %c0_i32, %c0_i32_0 : i32, i32
  }
  func.func @transform_12(%arg0: i32) -> (i32, i32) {
    %c0_i32 = arith.constant 0 : i32
    %c0_i32_0 = arith.constant 0 : i32
    %c0_i32_1 = arith.constant 0 : i32
    return %c0_i32, %c0_i32_0 : i32, i32
  }
  func.func @transform_13(%arg0: i32) -> (i32, i32) {
    %c0_i32 = arith.constant 0 : i32
    %c0_i32_0 = arith.constant 0 : i32
    return %arg0, %c0_i32 : i32, i32
  }
}

</mosaic_0001>

<llo_original>
// kernel: tpu_custom_call.1
$region0: #{tpu_custom_call.1}
  #allocation0 [shape = 'u32[]', space=smem, size = 0x4, offset = 0x4, fixed_abs, tag = 'smem constant byte address 0x4 - core index']
  #allocation1 [shape = 'u32[144,128]{1,0:T(1,128)}', space=vmem, size = 0x12000, scoped, tag = 'internal scratch']
  %s0 = inlined_call_operand.hbm [shape: bf16[16,32], index: 0, kind: input, shape index: {}]
  %s1 = inlined_call_operand.hbm [shape: bf16[32,128], index: 1, kind: input, shape index: {}]
  %s2 = inlined_call_operand.vmem [shape: f32[1,128], index: 2, kind: input, shape index: {}]
  %s3 = inlined_call_operand.hbm [shape: bf16[128,128], index: 3, kind: input, shape index: {}]
  %s4 = inlined_call_operand.vmem [shape: f32[1,128], index: 4, kind: input, shape index: {}]
  %s5 = inlined_call_operand.hbm [shape: bf16[128,128], index: 5, kind: input, shape index: {}]
  %s6 = inlined_call_operand.vmem [shape: f32[1,128], index: 6, kind: input, shape index: {}]
  %s7 = inlined_call_operand.hbm [shape: bf16[128,128], index: 7, kind: input, shape index: {}]
  %s8 = inlined_call_operand.vmem [shape: f32[1,128], index: 8, kind: input, shape index: {}]
  %s9 = inlined_call_operand.hbm [shape: bf16[128,256], index: 9, kind: input, shape index: {}]
  %s10 = inlined_call_operand.vmem [shape: f32[1,256], index: 10, kind: input, shape index: {}]
  %s11 = inlined_call_operand.hbm [shape: bf16[128,128], index: 11, kind: input, shape index: {}]
  %s12 = inlined_call_operand.vmem [shape: f32[1,128], index: 12, kind: input, shape index: {}]
  %s13 = inlined_call_operand.hbm [shape: f32[16,128], index: 13, kind: output, shape index: {}]
  %s14 = sld [smem:[#allocation0]]
  $region90: #{tpu_custom_call.1} parent=0
    _
  %s16 = ssub.s32 1, %s14
  %s17 = scalar_select 0, %s16, %s14
  $region1: #{tpu_custom_call.1} parent=0
    #allocation2 [shape = 'u8[4096]{0}', space=vmem, size = 0x1000, scoped, tag = 'input window, operand 0, single buffered']
    #allocation3 [shape = 's32[1]{0}', space=sflag, size = 0x4, scoped, tag = 'scoped memory for tpu_custom_call.1']
    #allocation4 [shape = 's32[1]{0}', space=sflag, size = 0x4, scoped, tag = 'scoped memory for tpu_custom_call.1']
    #allocation5 [shape = 'u8[8192]{0}', space=vmem, size = 0x2000, scoped, tag = 'input window, operand 1, single buffered']
    #allocation6 [shape = 's32[1]{0}', space=sflag, size = 0x4, scoped, tag = 'scoped memory for tpu_custom_call.1']
    #allocation7 [shape = 'u8[32768]{0}', space=vmem, size = 0x8000, scoped, tag = 'input window, operand 3, single buffered']
    #allocation8 [shape = 'u8[32768]{0}', space=vmem, size = 0x8000, scoped, tag = 'input window, operand 5, single buffered']
    #allocation9 [shape = 's32[1]{0}', space=sflag, size = 0x4, scoped, tag = 'scoped memory for tpu_custom_call.1']
    #allocation10 [shape = 'u8[32768]{0}', space=vmem, size = 0x8000, scoped, tag = 'input window, operand 7, single buffered']
    #allocation11 [shape = 'u8[65536]{0}', space=vmem, size = 0x10000, scoped, tag = 'input window, operand 9, single buffered']
    #allocation12 [shape = 's32[1]{0}', space=sflag, size = 0x4, scoped, tag = 'scoped memory for tpu_custom_call.1']
    #allocation13 [shape = 'u8[32768]{0}', space=vmem, size = 0x8000, scoped, tag = 'input window, operand 11, single buffered']
    #allocation14 [shape = 'u8[8192]{0}', space=vmem, size = 0x2000, scoped, tag = 'output window, operand 0, single buffered']
    %18 = vsyncpa [#allocation3], 0
    %19 = vsyncpa [#allocation6], 0
    %20 = vsyncpa [#allocation9], 0
    %21 = vsyncpa [#allocation12], 0
    %22 = vsyncpa [#allocation4], 0
    // Predicated region
    $region2: #{tpu_custom_call.1} parent=1 // pred_check
      _
    $region3: #{tpu_custom_call.1} parent=1 // pred_check_branch
      %24 = sbr.rel (0) target = $region5
    $region4: #{tpu_custom_call.1} parent=1 // pred_region
      %s26 = ssub.s32 128, 128
      %27 = vsyncadd [#allocation3], %s26
      %s28 = sshll.u32 [#allocation2], 4
      %s29 = int_to_ptr.vmem [resolvable:$true] %s28
      %34 = dma.hbm_to_vmem [thread:$0]  %s0, 128, %s29, [#allocation3], 64, 64, 4
    $region5: #{tpu_custom_call.1} parent=1 // pred_fallthru
      _
    // Predicated region
    $region6: #{tpu_custom_call.1} parent=1 // pred_check
      _
    $region7: #{tpu_custom_call.1} parent=1 // pred_check_branch
      %36 = sbr.rel (0) target = $region9
    $region8: #{tpu_custom_call.1} parent=1 // pred_region
      %s38 = ssub.s32 256, 256
      %39 = vsyncadd [#allocation6], %s38
      %s40 = sshll.u32 [#allocation5], 4
      %s41 = int_to_ptr.vmem [resolvable:$true] %s40
      %46 = dma.hbm_to_vmem [thread:$0]  %s1, 256, %s41, [#allocation6], 64, 64, 4
    $region9: #{tpu_custom_call.1} parent=1 // pred_fallthru
      _
    // Predicated region
    $region10: #{tpu_custom_call.1} parent=1 // pred_check
      _
    $region11: #{tpu_custom_call.1} parent=1 // pred_check_branch
      %48 = sbr.rel (0) target = $region13
    $region12: #{tpu_custom_call.1} parent=1 // pred_region
      _
    $region13: #{tpu_custom_call.1} parent=1 // pred_fallthru
      _
    // Predicated region
    $region14: #{tpu_custom_call.1} parent=1 // pred_check
      _
    $region15: #{tpu_custom_call.1} parent=1 // pred_check_branch
      %50 = sbr.rel (0) target = $region17
    $region16: #{tpu_custom_call.1} parent=1 // pred_region
      %s52 = ssub.s32 1024, 1024
      %53 = vsyncadd [#allocation6], %s52
      %s54 = sshll.u32 [#allocation7], 4
      %s55 = int_to_ptr.vmem [resolvable:$true] %s54
      %60 = dma.hbm_to_vmem [thread:$0]  %s3, 1024, %s55, [#allocation6], 64, 64, 4
    $region17: #{tpu_custom_call.1} parent=1 // pred_fallthru
      _
    // Predicated region
    $region18: #{tpu_custom_call.1} parent=1 // pred_check
      _
    $region19: #{tpu_custom_call.1} parent=1 // pred_check_branch
      %62 = sbr.rel (0) target = $region21
    $region20: #{tpu_custom_call.1} parent=1 // pred_region
      _
    $region21: #{tpu_custom_call.1} parent=1 // pred_fallthru
      _
    // Predicated region
    $region22: #{tpu_custom_call.1} parent=1 // pred_check
      _
    $region23: #{tpu_custom_call.1} parent=1 // pred_check_branch
      %64 = sbr.rel (0) target = $region25
    $region24: #{tpu_custom_call.1} parent=1 // pred_region
      %s66 = ssub.s32 1024, 1024
      %67 = vsyncadd [#allocation9], %s66
      %s68 = sshll.u32 [#allocation8], 4
      %s69 = int_to_ptr.vmem [resolvable:$true] %s68
      %74 = dma.hbm_to_vmem [thread:$0]  %s5, 1024, %s69, [#allocation9], 64, 64, 4
    $region25: #{tpu_custom_call.1} parent=1 // pred_fallthru
      _
    // Predicated region
    $region26: #{tpu_custom_call.1} parent=1 // pred_check
      _
    $region27: #{tpu_custom_call.1} parent=1 // pred_check_branch
      %76 = sbr.rel (0) target = $region29
    $region28: #{tpu_custom_call.1} parent=1 // pred_region
      _
    $region29: #{tpu_custom_call.1} parent=1 // pred_fallthru
      _
    // Predicated region
    $region30: #{tpu_custom_call.1} parent=1 // pred_check
      _
    $region31: #{tpu_custom_call.1} parent=1 // pred_check_branch
      %78 = sbr.rel (0) target = $region33
    $region32: #{tpu_custom_call.1} parent=1 // pred_region
      %s80 = ssub.s32 1024, 1024
      %81 = vsyncadd [#allocation9], %s80
      %s82 = sshll.u32 [#allocation10], 4
      %s83 = int_to_ptr.vmem [resolvable:$true] %s82
      %88 = dma.hbm_to_vmem [thread:$0]  %s7, 1024, %s83, [#allocation9], 64, 64, 4
    $region33: #{tpu_custom_call.1} parent=1 // pred_fallthru
      _
    // Predicated region
    $region34: #{tpu_custom_call.1} parent=1 // pred_check
      _
    $region35: #{tpu_custom_call.1} parent=1 // pred_check_branch
      %90 = sbr.rel (0) target = $region37
    $region36: #{tpu_custom_call.1} parent=1 // pred_region
      _
    $region37: #{tpu_custom_call.1} parent=1 // pred_fallthru
      _
    // Predicated region
    $region38: #{tpu_custom_call.1} parent=1 // pred_check
      _
    $region39: #{tpu_custom_call.1} parent=1 // pred_check_branch
      %92 = sbr.rel (0) target = $region41
    $region40: #{tpu_custom_call.1} parent=1 // pred_region
      %s94 = ssub.s32 2048, 2048
      %95 = vsyncadd [#allocation12], %s94
      %s96 = sshll.u32 [#allocation11], 4
      %s97 = int_to_ptr.vmem [resolvable:$true] %s96
      %102 = dma.hbm_to_vmem [thread:$0]  %s9, 2048, %s97, [#allocation12], 128, 128, 8
    $region41: #{tpu_custom_call.1} parent=1 // pred_fallthru
      _
    // Predicated region
    $region42: #{tpu_custom_call.1} parent=1 // pred_check
      _
    $region43: #{tpu_custom_call.1} parent=1 // pred_check_branch
      %104 = sbr.rel (0) target = $region45
    $region44: #{tpu_custom_call.1} parent=1 // pred_region
      _
    $region45: #{tpu_custom_call.1} parent=1 // pred_fallthru
      _
    // Predicated region
    $region46: #{tpu_custom_call.1} parent=1 // pred_check
      _
    $region47: #{tpu_custom_call.1} parent=1 // pred_check_branch
      %106 = sbr.rel (0) target = $region49
    $region48: #{tpu_custom_call.1} parent=1 // pred_region
      %s108 = ssub.s32 1024, 1024
      %109 = vsyncadd [#allocation12], %s108
      %s110 = sshll.u32 [#allocation13], 4
      %s111 = int_to_ptr.vmem [resolvable:$true] %s110
      %116 = dma.hbm_to_vmem [thread:$0]  %s11, 1024, %s111, [#allocation12], 64, 64, 4
    $region49: #{tpu_custom_call.1} parent=1 // pred_fallthru
      _
    // Predicated region
    $region50: #{tpu_custom_call.1} parent=1 // pred_check
      _
    $region51: #{tpu_custom_call.1} parent=1 // pred_check_branch
      %118 = sbr.rel (0) target = $region53
    $region52: #{tpu_custom_call.1} parent=1 // pred_region
      _
    $region53: #{tpu_custom_call.1} parent=1 // pred_fallthru
      _
    // Predicated region
    $region54: #{tpu_custom_call.1} parent=1 // pred_check
      _
    $region55: #{tpu_custom_call.1} parent=1 // pred_check_branch
      %120 = sbr.rel (0) target = $region57
    $region56: #{tpu_custom_call.1} parent=1 // pred_region
      %121 = dma.done [#allocation3], 128
    $region57: #{tpu_custom_call.1} parent=1 // pred_fallthru
      _
    // Predicated region
    $region58: #{tpu_custom_call.1} parent=1 // pred_check
      _
    $region59: #{tpu_custom_call.1} parent=1 // pred_check_branch
      %123 = sbr.rel (0) target = $region61
    $region60: #{tpu_custom_call.1} parent=1 // pred_region
      %124 = dma.done [#allocation6], 256
    $region61: #{tpu_custom_call.1} parent=1 // pred_fallthru
      _
    // Predicated region
    $region62: #{tpu_custom_call.1} parent=1 // pred_check
      _
    $region63: #{tpu_custom_call.1} parent=1 // pred_check_branch
      %126 = sbr.rel (0) target = $region65
    $region64: #{tpu_custom_call.1} parent=1 // pred_region
      %127 = dma.done [#allocation6], 1024
    $region65: #{tpu_custom_call.1} parent=1 // pred_fallthru
      _
    // Predicated region
    $region66: #{tpu_custom_call.1} parent=1 // pred_check
      _
    $region67: #{tpu_custom_call.1} parent=1 // pred_check_branch
      %129 = sbr.rel (0) target = $region69
    $region68: #{tpu_custom_call.1} parent=1 // pred_region
      %130 = dma.done [#allocation9], 1024
    $region69: #{tpu_custom_call.1} parent=1 // pred_fallthru
      _
    // Predicated region
    $region70: #{tpu_custom_call.1} parent=1 // pred_check
      _
    $region71: #{tpu_custom_call.1} parent=1 // pred_check_branch
      %132 = sbr.rel (0) target = $region73
    $region72: #{tpu_custom_call.1} parent=1 // pred_region
      %133 = dma.done [#allocation9], 1024
    $region73: #{tpu_custom_call.1} parent=1 // pred_fallthru
      _
    // Predicated region
    $region74: #{tpu_custom_call.1} parent=1 // pred_check
      _
    $region75: #{tpu_custom_call.1} parent=1 // pred_check_branch
      %135 = sbr.rel (0) target = $region77
    $region76: #{tpu_custom_call.1} parent=1 // pred_region
      %136 = dma.done [#allocation12], 2048
    $region77: #{tpu_custom_call.1} parent=1 // pred_fallthru
      _
    // Predicated region
    $region78: #{tpu_custom_call.1} parent=1 // pred_check
      _
    $region79: #{tpu_custom_call.1} parent=1 // pred_check_branch
      %138 = sbr.rel (0) target = $region81
    $region80: #{tpu_custom_call.1} parent=1 // pred_region
      %139 = dma.done [#allocation12], 1024
    $region81: #{tpu_custom_call.1} parent=1 // pred_fallthru
      _
    %v141 = vld [vmem:[#allocation2] sm:$0xf]
    %v142 = vld [vmem:[#allocation2 + $0x4] sm:$0xf]
    %v143 = vld [vmem:[#allocation5] sm:$0xf]
    %v144 = vld [vmem:[#allocation5 + $0x4] sm:$0xf]
    %v145 = vld [vmem:[#allocation5 + $0x8] sm:$0xf]
    %v146 = vld [vmem:[#allocation5 + $0xc] sm:$0xf]
    %v147 = vld [vmem:[%s2] sm:$0x1]
    %v149 = vlaneseq
    %v150 = vshrl.u32 %v149, 7
    %v151 = vsub.s32 0, %v150
    %v152 = vrot.slane %v147, %v151
    %v156 = vunpack.c.l.b16 %v141
    %v157 = vunpack.c.l.b16 %v142
    %v158 = vpack.c.b16 %v157, %v156
    %v163 = vunpack.c.l.b16 %v143
    %v164 = vunpack.c.l.b16 %v144
    %v165 = vunpack.c.l.b16 %v145
    %v166 = vunpack.c.l.b16 %v146
    %v167 = vpack.c.b16 %v164, %v163
    %v168 = vpack.c.b16 %v166, %v165
    %vm171 = vcmask 261120
    %v173 = vsel %vm171, %v158, 0
    %175 = vmatprep.subr.bf16.mxu0 0
    %176 = vmatpush1.bf16.msra.mxu0 %v167
    %177 = vmatprep.subr.bf16.mxu0 0
    %178 = vmatpush1.bf16.msra.mxu0 %v168
    %179 = vmatprep.subr.bf16.mxu0 0
    %180 = vmatpush1.bf16.msra.mxu0 0
    %181 = vmatprep.subr.bf16.mxu0 0
    %182 = vmatpush1.bf16.msra.mxu0 0
    %183 = vmatprep.subr.bf16.mxu0 0
    %184 = vmatpush1.bf16.msra.mxu0 0
    %185 = vmatprep.subr.bf16.mxu0 0
    %186 = vmatpush1.bf16.msra.mxu0 0
    %187 = vmatprep.subr.bf16.mxu0 0
    %188 = vmatpush1.bf16.msra.mxu0 0
    %189 = vmatprep.subr.bf16.mxu0 0
    %190 = vmatpush1.bf16.msra.mxu0 0
    %191 = vmatprep.subr.bf16.mxu0 0
    %192 = vmatpush1.bf16.msra.mxu0 0
    %193 = vmatprep.subr.bf16.mxu0 0
    %194 = vmatpush1.bf16.msra.mxu0 0
    %195 = vmatprep.subr.bf16.mxu0 0
    %196 = vmatpush1.bf16.msra.mxu0 0
    %197 = vmatprep.subr.bf16.mxu0 0
    %198 = vmatpush1.bf16.msra.mxu0 0
    %199 = vmatprep.subr.bf16.mxu0 0
    %200 = vmatpush1.bf16.msra.mxu0 0
    %201 = vmatprep.subr.bf16.mxu0 0
    %202 = vmatpush1.bf16.msra.mxu0 0
    %203 = vmatprep.subr.bf16.mxu0 0
    %204 = vmatpush1.bf16.msra.mxu0 0
    %205 = vmatprep.subr.bf16.mxu0 0
    %206 = vmatpush1.bf16.msra.mxu0 0
    %207 = vmatprep.mubr.bf16.mxu0 0
    %208 = vmatmul.mubr.bf16.gmra.mrb[0].mxu0 %v173
    %v209 = vpop.f32.mrb[0].mxu0
    %v210 = vadd.f32 %v152, %v209
    %v211 = vpop.f32.mrb[0].mxu0
    %v212 = vpop.f32.mrb[0].mxu0
    %v213 = vadd.f32 %v152, %v212
    %v214 = vpop.f32.mrb[0].mxu0
    %215 = vdwg.mxu0
    %v216 = vmax.f32 %v210, 0.0
    %v217 = vmax.f32 %v213, 0.0
    %v218 = vpack.c.bf16 %v217, %v216
    %v219 = vld [vmem:[#allocation7] sm:$0xf]
    %v220 = vld [vmem:[#allocation7 + $0x4] sm:$0xf]
    %v221 = vld [vmem:[#allocation7 + $0x8] sm:$0xf]
    %v222 = vld [vmem:[#allocation7 + $0xc] sm:$0xf]
    %v223 = vld [vmem:[#allocation7 + $0x10] sm:$0xf]
    %v224 = vld [vmem:[#allocation7 + $0x14] sm:$0xf]
    %v225 = vld [vmem:[#allocation7 + $0x18] sm:$0xf]
    %v226 = vld [vmem:[#allocation7 + $0x1c] sm:$0xf]
    %v227 = vld [vmem:[#allocation7 + $0x20] sm:$0xf]
    %v228 = vld [vmem:[#allocation7 + $0x24] sm:$0xf]
    %v229 = vld [vmem:[#allocation7 + $0x28] sm:$0xf]
    %v230 = vld [vmem:[#allocation7 + $0x2c] sm:$0xf]
    %v231 = vld [vmem:[#allocation7 + $0x30] sm:$0xf]
    %v232 = vld [vmem:[#allocation7 + $0x34] sm:$0xf]
    %v233 = vld [vmem:[#allocation7 + $0x38] sm:$0xf]
    %v234 = vld [vmem:[#allocation7 + $0x3c] sm:$0xf]
    %v235 = vld [vmem:[%s4] sm:$0x1]
    %v237 = vlaneseq
    %v238 = vshrl.u32 %v237, 7
    %v239 = vsub.s32 0, %v238
    %v240 = vrot.slane %v235, %v239
    %v258 = vunpack.c.l.b16 %v219
    %v259 = vunpack.c.l.b16 %v220
    %v260 = vunpack.c.l.b16 %v221
    %v261 = vunpack.c.l.b16 %v222
    %v262 = vunpack.c.l.b16 %v223
    %v263 = vunpack.c.l.b16 %v224
    %v264 = vunpack.c.l.b16 %v225
    %v265 = vunpack.c.l.b16 %v226
    %v266 = vunpack.c.l.b16 %v227
    %v267 = vunpack.c.l.b16 %v228
    %v268 = vunpack.c.l.b16 %v229
    %v269 = vunpack.c.l.b16 %v230
    %v270 = vunpack.c.l.b16 %v231
    %v271 = vunpack.c.l.b16 %v232
    %v272 = vunpack.c.l.b16 %v233
    %v273 = vunpack.c.l.b16 %v234
    %v274 = vpack.c.b16 %v259, %v258
    %v275 = vpack.c.b16 %v261, %v260
    %v276 = vpack.c.b16 %v263, %v262
    %v277 = vpack.c.b16 %v265, %v264
    %v278 = vpack.c.b16 %v267, %v266
    %v279 = vpack.c.b16 %v269, %v268
    %v280 = vpack.c.b16 %v271, %v270
    %v281 = vpack.c.b16 %v273, %v272
    %290 = vmatprep.subr.bf16.mxu0 0
    %291 = vmatpush1.bf16.msra.mxu0 %v274
    %292 = vmatprep.subr.bf16.mxu0 0
    %293 = vmatpush1.bf16.msra.mxu0 %v275
    %294 = vmatprep.subr.bf16.mxu0 0
    %295 = vmatpush1.bf16.msra.mxu0 %v276
    %296 = vmatprep.subr.bf16.mxu0 0
    %297 = vmatpush1.bf16.msra.mxu0 %v277
    %298 = vmatprep.subr.bf16.mxu0 0
    %299 = vmatpush1.bf16.msra.mxu0 %v278
    %300 = vmatprep.subr.bf16.mxu0 0
    %301 = vmatpush1.bf16.msra.mxu0 %v279
    %302 = vmatprep.subr.bf16.mxu0 0
    %303 = vmatpush1.bf16.msra.mxu0 %v280
    %304 = vmatprep.subr.bf16.mxu0 0
    %305 = vmatpush1.bf16.msra.mxu0 %v281
    %306 = vmatprep.subr.bf16.mxu0 0
    %307 = vmatpush1.bf16.msra.mxu0 0
    %308 = vmatprep.subr.bf16.mxu0 0
    %309 = vmatpush1.bf16.msra.mxu0 0
    %310 = vmatprep.subr.bf16.mxu0 0
    %311 = vmatpush1.bf16.msra.mxu0 0
    %312 = vmatprep.subr.bf16.mxu0 0
    %313 = vmatpush1.bf16.msra.mxu0 0
    %314 = vmatprep.subr.bf16.mxu0 0
    %315 = vmatpush1.bf16.msra.mxu0 0
    %316 = vmatprep.subr.bf16.mxu0 0
    %317 = vmatpush1.bf16.msra.mxu0 0
    %318 = vmatprep.subr.bf16.mxu0 0
    %319 = vmatpush1.bf16.msra.mxu0 0
    %320 = vmatprep.subr.bf16.mxu0 0
    %321 = vmatpush1.bf16.msra.mxu0 0
    %322 = vmatprep.mubr.bf16.mxu0 0
    %323 = vmatmul.mubr.bf16.gmra.mrb[0].mxu0 %v218
    %v324 = vpop.f32.mrb[0].mxu0
    %v325 = vadd.f32 %v240, %v324
    %v326 = vpop.f32.mrb[0].mxu0
    %v327 = vpop.f32.mrb[0].mxu0
    %v328 = vadd.f32 %v240, %v327
    %v329 = vpop.f32.mrb[0].mxu0
    %330 = vdwg.mxu0
    %v331 = vpack.c.bf16 %v328, %v325
    %v332 = vld [vmem:[#allocation8] sm:$0xf]
    %v333 = vld [vmem:[#allocation8 + $0x4] sm:$0xf]
    %v334 = vld [vmem:[#allocation8 + $0x8] sm:$0xf]
    %v335 = vld [vmem:[#allocation8 + $0xc] sm:$0xf]
    %v336 = vld [vmem:[#allocation8 + $0x10] sm:$0xf]
    %v337 = vld [vmem:[#allocation8 + $0x14] sm:$0xf]
    %v338 = vld [vmem:[#allocation8 + $0x18] sm:$0xf]
    %v339 = vld [vmem:[#allocation8 + $0x1c] sm:$0xf]
    %v340 = vld [vmem:[#allocation8 + $0x20] sm:$0xf]
    %v341 = vld [vmem:[#allocation8 + $0x24] sm:$0xf]
    %v342 = vld [vmem:[#allocation8 + $0x28] sm:$0xf]
    %v343 = vld [vmem:[#allocation8 + $0x2c] sm:$0xf]
    %v344 = vld [vmem:[#allocation8 + $0x30] sm:$0xf]
    %v345 = vld [vmem:[#allocation8 + $0x34] sm:$0xf]
    %v346 = vld [vmem:[#allocation8 + $0x38] sm:$0xf]
    %v347 = vld [vmem:[#allocation8 + $0x3c] sm:$0xf]
    %v348 = vld [vmem:[%s6] sm:$0x1]
    %v350 = vlaneseq
    %v351 = vshrl.u32 %v350, 7
    %v352 = vsub.s32 0, %v351
    %v353 = vrot.slane %v348, %v352
    %v371 = vunpack.c.l.b16 %v332
    %v372 = vunpack.c.l.b16 %v333
    %v373 = vunpack.c.l.b16 %v334
    %v374 = vunpack.c.l.b16 %v335
    %v375 = vunpack.c.l.b16 %v336
    %v376 = vunpack.c.l.b16 %v337
    %v377 = vunpack.c.l.b16 %v338
    %v378 = vunpack.c.l.b16 %v339
    %v379 = vunpack.c.l.b16 %v340
    %v380 = vunpack.c.l.b16 %v341
    %v381 = vunpack.c.l.b16 %v342
    %v382 = vunpack.c.l.b16 %v343
    %v383 = vunpack.c.l.b16 %v344
    %v384 = vunpack.c.l.b16 %v345
    %v385 = vunpack.c.l.b16 %v346
    %v386 = vunpack.c.l.b16 %v347
    %v387 = vpack.c.b16 %v372, %v371
    %v388 = vpack.c.b16 %v374, %v373
    %v389 = vpack.c.b16 %v376, %v375
    %v390 = vpack.c.b16 %v378, %v377
    %v391 = vpack.c.b16 %v380, %v379
    %v392 = vpack.c.b16 %v382, %v381
    %v393 = vpack.c.b16 %v384, %v383
    %v394 = vpack.c.b16 %v386, %v385
    %403 = vmatprep.subr.bf16.mxu0 0
    %404 = vmatpush1.bf16.msra.mxu0 %v387
    %405 = vmatprep.subr.bf16.mxu0 0
    %406 = vmatpush1.bf16.msra.mxu0 %v388
    %407 = vmatprep.subr.bf16.mxu0 0
    %408 = vmatpush1.bf16.msra.mxu0 %v389
    %409 = vmatprep.subr.bf16.mxu0 0
    %410 = vmatpush1.bf16.msra.mxu0 %v390
    %411 = vmatprep.subr.bf16.mxu0 0
    %412 = vmatpush1.bf16.msra.mxu0 %v391
    %413 = vmatprep.subr.bf16.mxu0 0
    %414 = vmatpush1.bf16.msra.mxu0 %v392
    %415 = vmatprep.subr.bf16.mxu0 0
    %416 = vmatpush1.bf16.msra.mxu0 %v393
    %417 = vmatprep.subr.bf16.mxu0 0
    %418 = vmatpush1.bf16.msra.mxu0 %v394
    %419 = vmatprep.subr.bf16.mxu0 0
    %420 = vmatpush1.bf16.msra.mxu0 0
    %421 = vmatprep.subr.bf16.mxu0 0
    %422 = vmatpush1.bf16.msra.mxu0 0
    %423 = vmatprep.subr.bf16.mxu0 0
    %424 = vmatpush1.bf16.msra.mxu0 0
    %425 = vmatprep.subr.bf16.mxu0 0
    %426 = vmatpush1.bf16.msra.mxu0 0
    %427 = vmatprep.subr.bf16.mxu0 0
    %428 = vmatpush1.bf16.msra.mxu0 0
    %429 = vmatprep.subr.bf16.mxu0 0
    %430 = vmatpush1.bf16.msra.mxu0 0
    %431 = vmatprep.subr.bf16.mxu0 0
    %432 = vmatpush1.bf16.msra.mxu0 0
    %433 = vmatprep.subr.bf16.mxu0 0
    %434 = vmatpush1.bf16.msra.mxu0 0
    %435 = vmatprep.mubr.bf16.mxu0 0
    %436 = vmatmul.mubr.bf16.gmra.mrb[0].mxu0 %v331
    %v437 = vpop.f32.mrb[0].mxu0
    %v438 = vadd.f32 %v353, %v437
    %v439 = vpop.f32.mrb[0].mxu0
    %v440 = vpop.f32.mrb[0].mxu0
    %v441 = vadd.f32 %v353, %v440
    %v442 = vpop.f32.mrb[0].mxu0
    %443 = vdwg.mxu0
    %v444 = vmax.f32 %v438, 0.0
    %v445 = vmax.f32 %v441, 0.0
    %v446 = vpack.c.bf16 %v445, %v444
    %v447 = vld [vmem:[#allocation10] sm:$0xf]
    %v448 = vld [vmem:[#allocation10 + $0x4] sm:$0xf]
    %v449 = vld [vmem:[#allocation10 + $0x8] sm:$0xf]
    %v450 = vld [vmem:[#allocation10 + $0xc] sm:$0xf]
    %v451 = vld [vmem:[#allocation10 + $0x10] sm:$0xf]
    %v452 = vld [vmem:[#allocation10 + $0x14] sm:$0xf]
    %v453 = vld [vmem:[#allocation10 + $0x18] sm:$0xf]
    %v454 = vld [vmem:[#allocation10 + $0x1c] sm:$0xf]
    %v455 = vld [vmem:[#allocation10 + $0x20] sm:$0xf]
    %v456 = vld [vmem:[#allocation10 + $0x24] sm:$0xf]
    %v457 = vld [vmem:[#allocation10 + $0x28] sm:$0xf]
    %v458 = vld [vmem:[#allocation10 + $0x2c] sm:$0xf]
    %v459 = vld [vmem:[#allocation10 + $0x30] sm:$0xf]
    %v460 = vld [vmem:[#allocation10 + $0x34] sm:$0xf]
    %v461 = vld [vmem:[#allocation10 + $0x38] sm:$0xf]
    %v462 = vld [vmem:[#allocation10 + $0x3c] sm:$0xf]
    %v463 = vld [vmem:[%s8] sm:$0x1]
    %v465 = vlaneseq
    %v466 = vshrl.u32 %v465, 7
    %v467 = vsub.s32 0, %v466
    %v468 = vrot.slane %v463, %v467
    %v486 = vunpack.c.l.b16 %v447
    %v487 = vunpack.c.l.b16 %v448
    %v488 = vunpack.c.l.b16 %v449
    %v489 = vunpack.c.l.b16 %v450
    %v490 = vunpack.c.l.b16 %v451
    %v491 = vunpack.c.l.b16 %v452
    %v492 = vunpack.c.l.b16 %v453
    %v493 = vunpack.c.l.b16 %v454
    %v494 = vunpack.c.l.b16 %v455
    %v495 = vunpack.c.l.b16 %v456
    %v496 = vunpack.c.l.b16 %v457
    %v497 = vunpack.c.l.b16 %v458
    %v498 = vunpack.c.l.b16 %v459
    %v499 = vunpack.c.l.b16 %v460
    %v500 = vunpack.c.l.b16 %v461
    %v501 = vunpack.c.l.b16 %v462
    %v502 = vpack.c.b16 %v487, %v486
    %v503 = vpack.c.b16 %v489, %v488
    %v504 = vpack.c.b16 %v491, %v490
    %v505 = vpack.c.b16 %v493, %v492
    %v506 = vpack.c.b16 %v495, %v494
    %v507 = vpack.c.b16 %v497, %v496
    %v508 = vpack.c.b16 %v499, %v498
    %v509 = vpack.c.b16 %v501, %v500
    %518 = vmatprep.subr.bf16.mxu0 0
    %519 = vmatpush1.bf16.msra.mxu0 %v502
    %520 = vmatprep.subr.bf16.mxu0 0
    %521 = vmatpush1.bf16.msra.mxu0 %v503
    %522 = vmatprep.subr.bf16.mxu0 0
    %523 = vmatpush1.bf16.msra.mxu0 %v504
    %524 = vmatprep.subr.bf16.mxu0 0
    %525 = vmatpush1.bf16.msra.mxu0 %v505
    %526 = vmatprep.subr.bf16.mxu0 0
    %527 = vmatpush1.bf16.msra.mxu0 %v506
    %528 = vmatprep.subr.bf16.mxu0 0
    %529 = vmatpush1.bf16.msra.mxu0 %v507
    %530 = vmatprep.subr.bf16.mxu0 0
    %531 = vmatpush1.bf16.msra.mxu0 %v508
    %532 = vmatprep.subr.bf16.mxu0 0
    %533 = vmatpush1.bf16.msra.mxu0 %v509
    %534 = vmatprep.subr.bf16.mxu0 0
    %535 = vmatpush1.bf16.msra.mxu0 0
    %536 = vmatprep.subr.bf16.mxu0 0
    %537 = vmatpush1.bf16.msra.mxu0 0
    %538 = vmatprep.subr.bf16.mxu0 0
    %539 = vmatpush1.bf16.msra.mxu0 0
    %540 = vmatprep.subr.bf16.mxu0 0
    %541 = vmatpush1.bf16.msra.mxu0 0
    %542 = vmatprep.subr.bf16.mxu0 0
    %543 = vmatpush1.bf16.msra.mxu0 0
    %544 = vmatprep.subr.bf16.mxu0 0
    %545 = vmatpush1.bf16.msra.mxu0 0
    %546 = vmatprep.subr.bf16.mxu0 0
    %547 = vmatpush1.bf16.msra.mxu0 0
    %548 = vmatprep.subr.bf16.mxu0 0
    %549 = vmatpush1.bf16.msra.mxu0 0
    %550 = vmatprep.mubr.bf16.mxu0 0
    %551 = vmatmul.mubr.bf16.gmra.mrb[0].mxu0 %v446
    %v552 = vpop.f32.mrb[0].mxu0
    %v553 = vadd.f32 %v468, %v552
    %v554 = vpop.f32.mrb[0].mxu0
    %v555 = vpop.f32.mrb[0].mxu0
    %v556 = vadd.f32 %v468, %v555
    %v557 = vpop.f32.mrb[0].mxu0
    %558 = vdwg.mxu0
    %v559 = vmax.f32 %v553, 0.0
    %v560 = vmax.f32 %v556, 0.0
    %v561 = vpack.c.bf16 %v560, %v559
    %v562 = vld [vmem:[#allocation11] sm:$0xff]
    %v563 = vld [vmem:[#allocation11 + $0x8] sm:$0xff]
    %v564 = vld [vmem:[#allocation11 + $0x10] sm:$0xff]
    %v565 = vld [vmem:[#allocation11 + $0x18] sm:$0xff]
    %v566 = vld [vmem:[#allocation11 + $0x20] sm:$0xff]
    %v567 = vld [vmem:[#allocation11 + $0x28] sm:$0xff]
    %v568 = vld [vmem:[#allocation11 + $0x30] sm:$0xff]
    %v569 = vld [vmem:[#allocation11 + $0x38] sm:$0xff]
    %v570 = vld [vmem:[#allocation11 + $0x40] sm:$0xff]
    %v571 = vld [vmem:[#allocation11 + $0x48] sm:$0xff]
    %v572 = vld [vmem:[#allocation11 + $0x50] sm:$0xff]
    %v573 = vld [vmem:[#allocation11 + $0x58] sm:$0xff]
    %v574 = vld [vmem:[#allocation11 + $0x60] sm:$0xff]
    %v575 = vld [vmem:[#allocation11 + $0x68] sm:$0xff]
    %v576 = vld [vmem:[#allocation11 + $0x70] sm:$0xff]
    %v577 = vld [vmem:[#allocation11 + $0x78] sm:$0xff]
    %v578 = vld [vmem:[%s10] sm:$0x3]
    %v580 = vlaneseq
    %v581 = vshrl.u32 %v580, 7
    %v582 = vsub.s32 0, %v581
    %v583 = vrot.slane %v578, %v582
    %v584 = vlaneseq
    %v585 = vshrl.u32 %v584, 7
    %v586 = vsub.s32 1, %v585
    %v587 = vrot.slane %v578, %v586
    %v606 = vunpack.c.l.b16 %v562
    %v607 = vunpack.c.h.b16 %v562
    %v608 = vunpack.c.l.b16 %v563
    %v609 = vunpack.c.h.b16 %v563
    %v610 = vunpack.c.l.b16 %v564
    %v611 = vunpack.c.h.b16 %v564
    %v612 = vunpack.c.l.b16 %v565
    %v613 = vunpack.c.h.b16 %v565
    %v614 = vunpack.c.l.b16 %v566
    %v615 = vunpack.c.h.b16 %v566
    %v616 = vunpack.c.l.b16 %v567
    %v617 = vunpack.c.h.b16 %v567
    %v618 = vunpack.c.l.b16 %v568
    %v619 = vunpack.c.h.b16 %v568
    %v620 = vunpack.c.l.b16 %v569
    %v621 = vunpack.c.h.b16 %v569
    %v622 = vunpack.c.l.b16 %v570
    %v623 = vunpack.c.h.b16 %v570
    %v624 = vunpack.c.l.b16 %v571
    %v625 = vunpack.c.h.b16 %v571
    %v626 = vunpack.c.l.b16 %v572
    %v627 = vunpack.c.h.b16 %v572
    %v628 = vunpack.c.l.b16 %v573
    %v629 = vunpack.c.h.b16 %v573
    %v630 = vunpack.c.l.b16 %v574
    %v631 = vunpack.c.h.b16 %v574
    %v632 = vunpack.c.l.b16 %v575
    %v633 = vunpack.c.h.b16 %v575
    %v634 = vunpack.c.l.b16 %v576
    %v635 = vunpack.c.h.b16 %v576
    %v636 = vunpack.c.l.b16 %v577
    %v637 = vunpack.c.h.b16 %v577
    %v638 = vpack.c.b16 %v608, %v606
    %v639 = vpack.c.b16 %v609, %v607
    %v640 = vpack.c.b16 %v612, %v610
    %v641 = vpack.c.b16 %v613, %v611
    %v642 = vpack.c.b16 %v616, %v614
    %v643 = vpack.c.b16 %v617, %v615
    %v644 = vpack.c.b16 %v620, %v618
    %v645 = vpack.c.b16 %v621, %v619
    %v646 = vpack.c.b16 %v624, %v622
    %v647 = vpack.c.b16 %v625, %v623
    %v648 = vpack.c.b16 %v628, %v626
    %v649 = vpack.c.b16 %v629, %v627
    %v650 = vpack.c.b16 %v632, %v630
    %v651 = vpack.c.b16 %v633, %v631
    %v652 = vpack.c.b16 %v636, %v634
    %v653 = vpack.c.b16 %v637, %v635
    %670 = vmatprep.subr.bf16.mxu0 %v639
    %671 = vmatpush1.bf16.msra.mxu0 %v638
    %672 = vmatprep.subr.bf16.mxu0 %v641
    %673 = vmatpush1.bf16.msra.mxu0 %v640
    %674 = vmatprep.subr.bf16.mxu0 %v643
    %675 = vmatpush1.bf16.msra.mxu0 %v642
    %676 = vmatprep.subr.bf16.mxu0 %v645
    %677 = vmatpush1.bf16.msra.mxu0 %v644
    %678 = vmatprep.subr.bf16.mxu0 %v647
    %679 = vmatpush1.bf16.msra.mxu0 %v646
    %680 = vmatprep.subr.bf16.mxu0 %v649
    %681 = vmatpush1.bf16.msra.mxu0 %v648
    %682 = vmatprep.subr.bf16.mxu0 %v651
    %683 = vmatpush1.bf16.msra.mxu0 %v650
    %684 = vmatprep.subr.bf16.mxu0 %v653
    %685 = vmatpush1.bf16.msra.mxu0 %v652
    %686 = vmatprep.subr.bf16.mxu0 0
    %687 = vmatpush1.bf16.msra.mxu0 0
    %688 = vmatprep.subr.bf16.mxu0 0
    %689 = vmatpush1.bf16.msra.mxu0 0
    %690 = vmatprep.subr.bf16.mxu0 0
    %691 = vmatpush1.bf16.msra.mxu0 0
    %692 = vmatprep.subr.bf16.mxu0 0
    %693 = vmatpush1.bf16.msra.mxu0 0
    %694 = vmatprep.subr.bf16.mxu0 0
    %695 = vmatpush1.bf16.msra.mxu0 0
    %696 = vmatprep.subr.bf16.mxu0 0
    %697 = vmatpush1.bf16.msra.mxu0 0
    %698 = vmatprep.subr.bf16.mxu0 0
    %699 = vmatpush1.bf16.msra.mxu0 0
    %700 = vmatprep.subr.bf16.mxu0 0
    %701 = vmatpush1.bf16.msra.mxu0 0
    %702 = vmatprep.mubr.bf16.mxu0 0
    %703 = vmatmul.mubr.bf16.gmra.mrb[0].mxu0 %v561
    %v704 = vpop.f32.mrb[0].mxu0
    %v705 = vadd.f32 %v583, %v704
    %v706 = vpop.f32.mrb[0].mxu0
    %v707 = vadd.f32 %v587, %v706
    %v708 = vpop.f32.mrb[0].mxu0
    %v709 = vadd.f32 %v583, %v708
    %v710 = vpop.f32.mrb[0].mxu0
    %v711 = vadd.f32 %v587, %v710
    %712 = vdwg.mxu0
    %v713 = vmax.f32 %v707, 0.0
    %v714 = vmax.f32 %v711, 0.0
    %v715 = vand.u32 2147483647, %v707
    %v716 = vand.u32 2147483647, %v711
    %v717 = vsub.f32 0.0, %v715
    %v718 = vsub.f32 0.0, %v716
    %v719 = vmul.f32 %v717, 1.442695
    %v720 = vpow.pop %v719
    %v721 = vmul.f32 %v718, 1.442695
    %v722 = vpow.pop %v721
    %v723 = vadd.f32 %v720, 1.0
    %v724 = vlog2.pop %v723
    %v725 = vmul.f32 %v724, 0.6931472
    %v726 = vmul.f32 -0.5, %v720
    %v727 = vadd.f32 %v726, 1.0
    %v728 = vmul.f32 %v727, %v720
    %v729 = vand.u32 2147483647, %v720
    %vm730 = vcmp.lt.f32.partialorder %v729, 0.0004427343
    %v731 = vsel %vm730, %v728, %v725
    %v732 = vadd.f32 %v722, 1.0
    %v733 = vlog2.pop %v732
    %v734 = vmul.f32 %v733, 0.6931472
    %v735 = vmul.f32 -0.5, %v722
    %v736 = vadd.f32 %v735, 1.0
    %v737 = vmul.f32 %v736, %v722
    %v738 = vand.u32 2147483647, %v722
    %vm739 = vcmp.lt.f32.partialorder %v738, 0.0004427343
    %v740 = vsel %vm739, %v737, %v734
    %v741 = vadd.f32 %v713, %v731
    %v742 = vadd.f32 %v714, %v740
    %v743 = vpack.c.bf16 %v709, %v705
    %v744 = vld [vmem:[#allocation13] sm:$0xf]
    %v745 = vld [vmem:[#allocation13 + $0x4] sm:$0xf]
    %v746 = vld [vmem:[#allocation13 + $0x8] sm:$0xf]
    %v747 = vld [vmem:[#allocation13 + $0xc] sm:$0xf]
    %v748 = vld [vmem:[#allocation13 + $0x10] sm:$0xf]
    %v749 = vld [vmem:[#allocation13 + $0x14] sm:$0xf]
    %v750 = vld [vmem:[#allocation13 + $0x18] sm:$0xf]
    %v751 = vld [vmem:[#allocation13 + $0x1c] sm:$0xf]
    %v752 = vld [vmem:[#allocation13 + $0x20] sm:$0xf]
    %v753 = vld [vmem:[#allocation13 + $0x24] sm:$0xf]
    %v754 = vld [vmem:[#allocation13 + $0x28] sm:$0xf]
    %v755 = vld [vmem:[#allocation13 + $0x2c] sm:$0xf]
    %v756 = vld [vmem:[#allocation13 + $0x30] sm:$0xf]
    %v757 = vld [vmem:[#allocation13 + $0x34] sm:$0xf]
    %v758 = vld [vmem:[#allocation13 + $0x38] sm:$0xf]
    %v759 = vld [vmem:[#allocation13 + $0x3c] sm:$0xf]
    %v760 = vld [vmem:[%s12] sm:$0x1]
    %v762 = vlaneseq
    %v763 = vshrl.u32 %v762, 7
    %v764 = vsub.s32 0, %v763
    %v765 = vrot.slane %v760, %v764
    %v783 = vunpack.c.l.b16 %v744
    %v784 = vunpack.c.l.b16 %v745
    %v785 = vunpack.c.l.b16 %v746
    %v786 = vunpack.c.l.b16 %v747
    %v787 = vunpack.c.l.b16 %v748
    %v788 = vunpack.c.l.b16 %v749
    %v789 = vunpack.c.l.b16 %v750
    %v790 = vunpack.c.l.b16 %v751
    %v791 = vunpack.c.l.b16 %v752
    %v792 = vunpack.c.l.b16 %v753
    %v793 = vunpack.c.l.b16 %v754
    %v794 = vunpack.c.l.b16 %v755
    %v795 = vunpack.c.l.b16 %v756
    %v796 = vunpack.c.l.b16 %v757
    %v797 = vunpack.c.l.b16 %v758
    %v798 = vunpack.c.l.b16 %v759
    %v799 = vpack.c.b16 %v784, %v783
    %v800 = vpack.c.b16 %v786, %v785
    %v801 = vpack.c.b16 %v788, %v787
    %v802 = vpack.c.b16 %v790, %v789
    %v803 = vpack.c.b16 %v792, %v791
    %v804 = vpack.c.b16 %v794, %v793
    %v805 = vpack.c.b16 %v796, %v795
    %v806 = vpack.c.b16 %v798, %v797
    %815 = vmatprep.subr.bf16.mxu0 0
    %816 = vmatpush1.bf16.msra.mxu0 %v799
    %817 = vmatprep.subr.bf16.mxu0 0
    %818 = vmatpush1.bf16.msra.mxu0 %v800
    %819 = vmatprep.subr.bf16.mxu0 0
    %820 = vmatpush1.bf16.msra.mxu0 %v801
    %821 = vmatprep.subr.bf16.mxu0 0
    %822 = vmatpush1.bf16.msra.mxu0 %v802
    %823 = vmatprep.subr.bf16.mxu0 0
    %824 = vmatpush1.bf16.msra.mxu0 %v803
    %825 = vmatprep.subr.bf16.mxu0 0
    %826 = vmatpush1.bf16.msra.mxu0 %v804
    %827 = vmatprep.subr.bf16.mxu0 0
    %828 = vmatpush1.bf16.msra.mxu0 %v805
    %829 = vmatprep.subr.bf16.mxu0 0
    %830 = vmatpush1.bf16.msra.mxu0 %v806
    %831 = vmatprep.subr.bf16.mxu0 0
    %832 = vmatpush1.bf16.msra.mxu0 0
    %833 = vmatprep.subr.bf16.mxu0 0
    %834 = vmatpush1.bf16.msra.mxu0 0
    %835 = vmatprep.subr.bf16.mxu0 0
    %836 = vmatpush1.bf16.msra.mxu0 0
    %837 = vmatprep.subr.bf16.mxu0 0
    %838 = vmatpush1.bf16.msra.mxu0 0
    %839 = vmatprep.subr.bf16.mxu0 0
    %840 = vmatpush1.bf16.msra.mxu0 0
    %841 = vmatprep.subr.bf16.mxu0 0
    %842 = vmatpush1.bf16.msra.mxu0 0
    %843 = vmatprep.subr.bf16.mxu0 0
    %844 = vmatpush1.bf16.msra.mxu0 0
    %845 = vmatprep.subr.bf16.mxu0 0
    %846 = vmatpush1.bf16.msra.mxu0 0
    %847 = vmatprep.mubr.bf16.mxu0 0
    %848 = vmatmul.mubr.bf16.gmra.mrb[0].mxu0 %v743
    %v849 = vpop.f32.mrb[0].mxu0
    %v850 = vadd.f32 %v765, %v849
    %v851 = vpop.f32.mrb[0].mxu0
    %v852 = vpop.f32.mrb[0].mxu0
    %v853 = vadd.f32 %v765, %v852
    %v854 = vpop.f32.mrb[0].mxu0
    %855 = vdwg.mxu0
    %v856 = vlaneseq
    %v857 = vand.u32 %v856, 127
    %858 = vrot.lane.b32.xlu0 %v705, 4
    %v859 = vpop.permute.xlu0 %858
    %860 = vrot.lane.b32.xlu0 %v709, 4
    %v861 = vpop.permute.xlu0 %860
    %862 = vrot.lane.b32.xlu0 %v741, 12
    %v863 = vpop.permute.xlu0 %862
    %864 = vrot.lane.b32.xlu0 %v742, 12
    %v865 = vpop.permute.xlu0 %864
    %vm866 = vcmp.lt.s32.totalorder %v857, 4
    %vm867 = vcmp.lt.s32.totalorder %v857, 12
    %v868 = vsel %vm867, %v859, %v863
    %v869 = vsel %vm867, %v861, %v865
    %v870 = vsel %vm866, %v850, %v868
    %v871 = vsel %vm866, %v853, %v869
    %872 = vst [vmem:[#allocation14] sm:$0xff] %v870
    %873 = vst [vmem:[#allocation14 + $0x8] sm:$0xff] %v871
    // Predicated region
    $region82: #{tpu_custom_call.1} parent=1 // pred_check
      _
    $region83: #{tpu_custom_call.1} parent=1 // pred_check_branch
      %875 = sbr.rel (0) target = $region85
    $region84: #{tpu_custom_call.1} parent=1 // pred_region
      %s877 = ssub.s32 256, 256
      %878 = vsyncadd [#allocation4], %s877
      %s879 = sshll.u32 [#allocation14], 4
      %s880 = int_to_ptr.vmem [resolvable:$true] %s879
      %885 = dma.vmem_to_hbm [thread:$0]  %s880, 256, %s13, [#allocation4], 128, 128, 8
    $region85: #{tpu_custom_call.1} parent=1 // pred_fallthru
      _
    // Predicated region
    $region86: #{tpu_custom_call.1} parent=1 // pred_check
      _
    $region87: #{tpu_custom_call.1} parent=1 // pred_check_branch
      %887 = sbr.rel (0) target = $region89
    $region88: #{tpu_custom_call.1} parent=1 // pred_region
      %888 = dma.done [#allocation4], 256
    $region89: #{tpu_custom_call.1} parent=1 // pred_fallthru
      _
    %889 = vsyncpa [#allocation3], 1
    %890 = vsyncpa [#allocation6], 1
    %891 = vsyncpa [#allocation9], 1
    %892 = vsyncpa [#allocation12], 1
    %893 = vsyncpa [#allocation4], 1

</llo_original>
